<compile_context>
chip_gen: v7x
topology: tpu7x:2x2x1
jax: 0.10.0
libtpu: 0.0.40
codegen_flags: <defaults>
</compile_context>

<pallas_src>
import jax
import jax.numpy as jnp
from jax import lax
from jax.experimental import pallas as pl
from jax.experimental.pallas import tpu as pltpu

NEG_SLOPE = 0.01  # PyTorch F.leaky_relu default


def _lrelu(x):
    return jnp.where(x > 0, x, NEG_SLOPE * x)


def net2048_kernel(x_ref,                  # (TB, 32)  bf16, batch-major input tile
                   w1_ref, b1_ref,         # (48, 32) bf16, (48, 1) f32   feature.conv1 (folded)
                   w2_ref, b2_ref,         # (64, 48) bf16, (64, 1) f32   feature.conv2 (folded)
                   wA_ref, bA_ref,         # (128,64) bf16, (128,1) f32   [vfc_1 ; out.conv1]
                   wB_ref, bB_ref,         # (40,128) bf16, (40, 1) f32   [vfc_2(+pad) (+) pfc_1]
                   wp2_ref, bp2_ref,       # (4, 32)  bf16, (4,  1) f32   pfc_2
                   out_ref):               # (8, TB) f32: row0=v, rows1:5=log p, rows5:8 pad
    dn = (((1,), (1,)), ((), ()))          # W @ X^T : contract the 32-wide feature axes

    # FeatureBlock — convs pre-folded into dense matrices; batch lands on lanes.
    f1 = _lrelu(lax.dot_general(w1_ref[...], x_ref[...], dn,
                                preferred_element_type=jnp.float32)
                + b1_ref[...])                                   # (48, TB)
    f2 = _lrelu(jnp.dot(w2_ref[...], f1.astype(jnp.bfloat16),
                        preferred_element_type=jnp.float32)
                + b2_ref[...])                                   # (64, TB)

    # Fused heads: rows 0:32 = value fc1, rows 32:128 = folded policy conv.
    h1 = _lrelu(jnp.dot(wA_ref[...], f2.astype(jnp.bfloat16),
                        preferred_element_type=jnp.float32)
                + bA_ref[...])                                   # (128, TB)

    # Block-diagonal second stage: row 0 = value output, rows 8:40 = pfc_1.
    h2 = _lrelu(jnp.dot(wB_ref[...], h1.astype(jnp.bfloat16),
                        preferred_element_type=jnp.float32)
                + bB_ref[...])                                   # (40, TB)

    v = h2[0:1, :]                                               # (1, TB)
    p1 = h2[8:40, :]                                             # (32, TB), 8-aligned slice

    logits = (jnp.dot(wp2_ref[...], p1.astype(jnp.bfloat16),
                      preferred_element_type=jnp.float32)
              + bp2_ref[...])                                    # (4, TB)

    # log_softmax over the 4 policy logits (sublane reduce, batch on lanes), f32.
    m = jnp.max(logits, axis=0, keepdims=True)
    z = logits - m
    lse = jnp.log(jnp.sum(jnp.exp(z), axis=0, keepdims=True))
    logp = z - lse                                               # (4, TB)

    pad = jnp.zeros((3, out_ref.shape[1]), jnp.float32)
    out_ref[...] = jnp.concatenate([v, logp, pad], axis=0)       # one unmasked (8, TB) store


# ---------------------------------------------------------------------------
# Plain-JAX glue: fold Conv1d weights into dense matrices, fuse head layers.
# ---------------------------------------------------------------------------
def _round_up(n, m):
    return -(-n // m) * m


def _conv_as_matrix(w, lin):
    """Conv1d weight (Cout, Cin, K) -> (Cout*Lout, Cin*Lin) dense matrix M so
    that M @ x_flat == flatten(conv1d(x)), with x_flat[c*Lin + j] = x[c, j]
    and output index o*Lout + l (PyTorch channel-first flatten order)."""
    cout, cin, k = w.shape
    lout = lin - k + 1
    shift = (jnp.arange(lin)[None, None, :] ==
             (jnp.arange(k)[:, None, None] + jnp.arange(lout)[None, :, None]))
    shift = shift.astype(w.dtype)                        # (K, Lout, Lin)
    mat = jnp.einsum('ock,klj->olcj', w, shift)          # (Cout, Lout, Cin, Lin)
    return mat.reshape(cout * lout, cin * lin)


def _conv_bias(b, lout):
    return jnp.repeat(b, lout).reshape(-1, 1)            # (Cout*Lout, 1)


def _pick_tile(b_pad):
    """Largest multiple-of-128 tile dividing b_pad, capped at 1024 lanes;
    prefer >=2 grid steps so v7x's two TensorCores both get work."""
    n = b_pad // 128
    cap = min(n, 8)
    divisors = [d for d in range(1, cap + 1) if n % d == 0]
    multi = [d for d in divisors if n // d >= 2]
    return 128 * (max(multi) if multi else max(divisors))


@jax.jit
def net2048_forward(x, params):
    """x: (B, 4, 4) float32. params: PyTorch-layout weights. Returns (v, p)."""
    (w1, b1, w2, b2, wv1, bv1, wv2, bv2,
     wc, bc, wp1, bp1, wp2, bp2) = params
    B = x.shape[0]
    f32, bf16 = jnp.float32, jnp.bfloat16

    # (row-flatten, col-flatten) conv input; stays batch-major (B_pad, 32) so
    # no materialized HBM transpose — the kernel contracts on the last axis.
    x_h = x.reshape(B, 16)
    x_v = jnp.swapaxes(x, 1, 2).reshape(B, 16)
    inp = jnp.concatenate([x_h, x_v], axis=1).astype(bf16)            # (B, 32)

    B_pad = _round_up(B, 128)
    TB = _pick_tile(B_pad)
    inp = jnp.pad(inp, ((0, B_pad - B), (0, 0)))                      # (B_pad, 32)

    w1d = _conv_as_matrix(w1, 16)                                     # (48, 32)
    w2d = _conv_as_matrix(w2, 12)                                     # (64, 48)
    wcd = _conv_as_matrix(wc, 8)                                      # (96, 64)

    # Fusion A: value fc1 and policy conv share f2 -> one (128, 64) matmul.
    wA = jnp.concatenate([wv1, wcd], axis=0)                          # (128, 64)
    bA = jnp.concatenate([bv1.reshape(-1, 1), _conv_bias(bc, 6)], axis=0)

    # Fusion B: block-diag [vfc_2 (+) pfc_1] over h1 = [v1 ; pc]; value row is
    # padded to a full sublane group of 8 so the policy slice stays 8-aligned.
    wB = jnp.zeros((40, 128), f32)
    wB = wB.at[0, 0:32].set(wv2[0])
    wB = wB.at[8:40, 32:128].set(wp1)
    bB = jnp.zeros((40, 1), f32)
    bB = bB.at[0, 0].set(bv2[0])
    bB = bB.at[8:40, 0].set(bp1)

    weights = (
        w1d.astype(bf16), _conv_bias(b1, 12),          # (48,32),  (48,1)
        w2d.astype(bf16), _conv_bias(b2, 8),           # (64,48),  (64,1)
        wA.astype(bf16),  bA.astype(f32),              # (128,64), (128,1)
        wB.astype(bf16),  bB,                          # (40,128), (40,1)
        wp2.astype(bf16), bp2.reshape(-1, 1).astype(f32),  # (4,32), (4,1)
    )

    def wspec(arr):
        return pl.BlockSpec(arr.shape, lambda b: (0, 0))

    in_specs = [pl.BlockSpec((TB, 32), lambda b: (b, 0))]
    in_specs += [wspec(w) for w in weights]

    out = pl.pallas_call(
        net2048_kernel,
        out_shape=jax.ShapeDtypeStruct((8, B_pad), f32),
        grid=(B_pad // TB,),
        in_specs=in_specs,
        out_specs=pl.BlockSpec((8, TB), lambda b: (0, b)),
        compiler_params=pltpu.CompilerParams(
            dimension_semantics=("parallel",)),
    )(inp, *weights)

    return out[0:1, :B].T, out[1:5, :B].T              # (B, 1), (B, 4)


# ---------------------------------------------------------------------------
# Pure-JAX reference mirroring the PyTorch forward exactly (f32 throughout).
# ---------------------------------------------------------------------------
def net2048_reference(x, params):
    (w1, b1, w2, b2, wv1, bv1, wv2, bv2,
     wc, bc, wp1, bp1, wp2, bp2) = params
    B = x.shape[0]
    x_h = x.reshape(B, 1, 16)
    x_v = jnp.swapaxes(x, 1, 2).reshape(B, 1, 16)
    inp = jnp.concatenate([x_h, x_v], axis=1)          # (B, 2, 16)

    def conv1d(a, w, b):
        K = w.shape[2]
        Lout = a.shape[2] - K + 1
        out = b[None, :, None]
        for k in range(K):
            out = out + jnp.einsum('bcl,oc->bol', a[:, :, k:k + Lout], w[:, :, k])
        return out

    f1 = _lrelu(conv1d(inp, w1, b1))                   # (B, 4, 12)
    f2 = _lrelu(conv1d(f1, w2, b2))                    # (B, 8, 8)
    v = _lrelu(f2.reshape(B, -1) @ wv1.T + bv1)
    v = _lrelu(v @ wv2.T + bv2)                        # (B, 1)
    p = _lrelu(conv1d(f2, wc, bc))                     # (B, 16, 6)
    p = _lrelu(p.reshape(B, -1) @ wp1.T + bp1)
    logits = p @ wp2.T + bp2                           # (B, 4)
    return v, jax.nn.log_softmax(logits, axis=1)


def init_params(key):
    ks = jax.random.split(key, 14)

    def w(k, shape, s=0.1):
        return (s * jax.random.normal(k, shape)).astype(jnp.float32)

    return (
        w(ks[0], (4, 2, 5)),  w(ks[1], (4,)),       # feature.conv1
        w(ks[2], (8, 4, 5)),  w(ks[3], (8,)),       # feature.conv2
        w(ks[4], (32, 64)),   w(ks[5], (32,)),      # out.vfc_1
        w(ks[6], (1, 32)),    w(ks[7], (1,)),       # out.vfc_2
        w(ks[8], (16, 8, 3)), w(ks[9], (16,)),      # out.conv1
        w(ks[10], (32, 96)),  w(ks[11], (32,)),     # out.pfc_1
        w(ks[12], (4, 32)),   w(ks[13], (4,)),      # out.pfc_2
    )


if __name__ == "__main__":
    key = jax.random.PRNGKey(0)
    pkey, xkey = jax.random.split(key)
    params = init_params(pkey)
    x = jax.random.normal(xkey, (2, 4, 4), dtype=jnp.float32)  # batch of 2048 boards

    v, p = net2048_forward(x, params)
    v, p = jax.block_until_ready((v, p))

    v_ref, p_ref = net2048_reference(x, params)
    assert v.shape == (2, 1) and p.shape == (2, 4)
    assert jnp.allclose(v, v_ref, atol=2e-3, rtol=2e-3)
    assert jnp.allclose(p, p_ref, atol=2e-3, rtol=2e-3)
    print("KERNEL_OK")
</pallas_src>

<mosaic_0001>
module attributes {stable_mosaic.version = 11 : i64} {
  func.func @net2048_kernel(%arg0: i32, %arg1: memref<128x32xbf16, #tpu.memory_space<vmem>>, %arg2: memref<48x32xbf16, #tpu.memory_space<vmem>>, %arg3: memref<48x1xf32, #tpu.memory_space<vmem>>, %arg4: memref<64x48xbf16, #tpu.memory_space<vmem>>, %arg5: memref<64x1xf32, #tpu.memory_space<vmem>>, %arg6: memref<128x64xbf16, #tpu.memory_space<vmem>>, %arg7: memref<128x1xf32, #tpu.memory_space<vmem>>, %arg8: memref<40x128xbf16, #tpu.memory_space<vmem>>, %arg9: memref<40x1xf32, #tpu.memory_space<vmem>>, %arg10: memref<4x32xbf16, #tpu.memory_space<vmem>>, %arg11: memref<4x1xf32, #tpu.memory_space<vmem>>, %arg12: memref<8x128xf32, #tpu.memory_space<vmem>>) attributes {dimension_semantics = [#tpu.dimension_semantics<parallel>], iteration_bounds = array<i64: 1>, scalar_prefetch = 0 : i64, scratch_operands = 0 : i64, tpu.core_type = #tpu.core_type<tc>, window_params = [{transform_indices = @transform_0, window_bounds = array<i64: 128, 32>}, {pipeline_mode = #tpu.pipeline_mode<synchronous>, transform_indices = @transform_1, window_bounds = array<i64: 48, 32>}, {pipeline_mode = #tpu.pipeline_mode<synchronous>, transform_indices = @transform_2, window_bounds = array<i64: 48, 1>}, {pipeline_mode = #tpu.pipeline_mode<synchronous>, transform_indices = @transform_3, window_bounds = array<i64: 64, 48>}, {pipeline_mode = #tpu.pipeline_mode<synchronous>, transform_indices = @transform_4, window_bounds = array<i64: 64, 1>}, {pipeline_mode = #tpu.pipeline_mode<synchronous>, transform_indices = @transform_5, window_bounds = array<i64: 128, 64>}, {pipeline_mode = #tpu.pipeline_mode<synchronous>, transform_indices = @transform_6, window_bounds = array<i64: 128, 1>}, {pipeline_mode = #tpu.pipeline_mode<synchronous>, transform_indices = @transform_7, window_bounds = array<i64: 40, 128>}, {pipeline_mode = #tpu.pipeline_mode<synchronous>, transform_indices = @transform_8, window_bounds = array<i64: 40, 1>}, {pipeline_mode = #tpu.pipeline_mode<synchronous>, transform_indices = @transform_9, window_bounds = array<i64: 4, 32>}, {pipeline_mode = #tpu.pipeline_mode<synchronous>, transform_indices = @transform_10, window_bounds = array<i64: 4, 1>}, {transform_indices = @transform_11, window_bounds = array<i64: 8, 128>}]} {
    %c0 = arith.constant 0 : index
    %c0_0 = arith.constant 0 : index
    %0 = vector.load %arg2[%c0, %c0_0] : memref<48x32xbf16, #tpu.memory_space<vmem>>, vector<48x32xbf16>
    %c0_1 = arith.constant 0 : index
    %c0_2 = arith.constant 0 : index
    %1 = vector.load %arg1[%c0_1, %c0_2] : memref<128x32xbf16, #tpu.memory_space<vmem>>, vector<128x32xbf16>
    %cst = arith.constant dense<0.000000e+00> : vector<48x128xf32>
    %2 = tpu.matmul %0, %1, %cst {dimension_numbers = #tpu.dot_dimension_numbers<[1], [1], [0], [0], [0, 0, 1, 0], [], []>} : vector<48x32xbf16>, vector<128x32xbf16>, vector<48x128xf32> -> vector<48x128xf32>
    %c0_3 = arith.constant 0 : index
    %c0_4 = arith.constant 0 : index
    %3 = vector.load %arg3[%c0_3, %c0_4] : memref<48x1xf32, #tpu.memory_space<vmem>>, vector<48x1xf32>
    %4 = vector.broadcast %3 : vector<48x1xf32> to vector<48x128xf32>
    %5 = arith.addf %2, %4 : vector<48x128xf32>
    %cst_5 = arith.constant 0.000000e+00 : f32
    %6 = vector.broadcast %cst_5 : f32 to vector<48x128xf32>
    %7 = arith.cmpf ogt, %5, %6 : vector<48x128xf32>
    %cst_6 = arith.constant 0.00999999977 : f32
    %8 = vector.broadcast %cst_6 : f32 to vector<48x128xf32>
    %9 = arith.mulf %8, %5 : vector<48x128xf32>
    %10 = arith.select %7, %5, %9 : vector<48x128xi1>, vector<48x128xf32>
    %c0_7 = arith.constant 0 : index
    %c0_8 = arith.constant 0 : index
    %11 = vector.load %arg4[%c0_7, %c0_8] : memref<64x48xbf16, #tpu.memory_space<vmem>>, vector<64x48xbf16>
    %12 = arith.truncf %10 : vector<48x128xf32> to vector<48x128xbf16>
    %cst_9 = arith.constant dense<0.000000e+00> : vector<64x128xf32>
    %13 = tpu.matmul %11, %12, %cst_9 {dimension_numbers = #tpu.dot_dimension_numbers<[1], [0], [0], [1], [0, 0, 1, 1], [], []>} : vector<64x48xbf16>, vector<48x128xbf16>, vector<64x128xf32> -> vector<64x128xf32>
    %c0_10 = arith.constant 0 : index
    %c0_11 = arith.constant 0 : index
    %14 = vector.load %arg5[%c0_10, %c0_11] : memref<64x1xf32, #tpu.memory_space<vmem>>, vector<64x1xf32>
    %15 = vector.broadcast %14 : vector<64x1xf32> to vector<64x128xf32>
    %16 = arith.addf %13, %15 : vector<64x128xf32>
    %cst_12 = arith.constant 0.000000e+00 : f32
    %17 = vector.broadcast %cst_12 : f32 to vector<64x128xf32>
    %18 = arith.cmpf ogt, %16, %17 : vector<64x128xf32>
    %cst_13 = arith.constant 0.00999999977 : f32
    %19 = vector.broadcast %cst_13 : f32 to vector<64x128xf32>
    %20 = arith.mulf %19, %16 : vector<64x128xf32>
    %21 = arith.select %18, %16, %20 : vector<64x128xi1>, vector<64x128xf32>
    %c0_14 = arith.constant 0 : index
    %c0_15 = arith.constant 0 : index
    %22 = vector.load %arg6[%c0_14, %c0_15] : memref<128x64xbf16, #tpu.memory_space<vmem>>, vector<128x64xbf16>
    %23 = arith.truncf %21 : vector<64x128xf32> to vector<64x128xbf16>
    %cst_16 = arith.constant dense<0.000000e+00> : vector<128x128xf32>
    %24 = tpu.matmul %22, %23, %cst_16 {dimension_numbers = #tpu.dot_dimension_numbers<[1], [0], [0], [1], [0, 0, 1, 1], [], []>} : vector<128x64xbf16>, vector<64x128xbf16>, vector<128x128xf32> -> vector<128x128xf32>
    %c0_17 = arith.constant 0 : index
    %c0_18 = arith.constant 0 : index
    %25 = vector.load %arg7[%c0_17, %c0_18] : memref<128x1xf32, #tpu.memory_space<vmem>>, vector<128x1xf32>
    %26 = vector.broadcast %25 : vector<128x1xf32> to vector<128x128xf32>
    %27 = arith.addf %24, %26 : vector<128x128xf32>
    %cst_19 = arith.constant 0.000000e+00 : f32
    %28 = vector.broadcast %cst_19 : f32 to vector<128x128xf32>
    %29 = arith.cmpf ogt, %27, %28 : vector<128x128xf32>
    %cst_20 = arith.constant 0.00999999977 : f32
    %30 = vector.broadcast %cst_20 : f32 to vector<128x128xf32>
    %31 = arith.mulf %30, %27 : vector<128x128xf32>
    %32 = arith.select %29, %27, %31 : vector<128x128xi1>, vector<128x128xf32>
    %c0_21 = arith.constant 0 : index
    %c0_22 = arith.constant 0 : index
    %33 = vector.load %arg8[%c0_21, %c0_22] : memref<40x128xbf16, #tpu.memory_space<vmem>>, vector<40x128xbf16>
    %34 = arith.truncf %32 : vector<128x128xf32> to vector<128x128xbf16>
    %cst_23 = arith.constant dense<0.000000e+00> : vector<40x128xf32>
    %35 = tpu.matmul %33, %34, %cst_23 {dimension_numbers = #tpu.dot_dimension_numbers<[1], [0], [0], [1], [0, 0, 1, 1], [], []>} : vector<40x128xbf16>, vector<128x128xbf16>, vector<40x128xf32> -> vector<40x128xf32>
    %c0_24 = arith.constant 0 : index
    %c0_25 = arith.constant 0 : index
    %36 = vector.load %arg9[%c0_24, %c0_25] : memref<40x1xf32, #tpu.memory_space<vmem>>, vector<40x1xf32>
    %37 = vector.broadcast %36 : vector<40x1xf32> to vector<40x128xf32>
    %38 = arith.addf %35, %37 : vector<40x128xf32>
    %cst_26 = arith.constant 0.000000e+00 : f32
    %39 = vector.broadcast %cst_26 : f32 to vector<40x128xf32>
    %40 = arith.cmpf ogt, %38, %39 : vector<40x128xf32>
    %cst_27 = arith.constant 0.00999999977 : f32
    %41 = vector.broadcast %cst_27 : f32 to vector<40x128xf32>
    %42 = arith.mulf %41, %38 : vector<40x128xf32>
    %43 = arith.select %40, %38, %42 : vector<40x128xi1>, vector<40x128xf32>
    %44 = vector.extract_strided_slice %43 {offsets = [0, 0], sizes = [1, 128], strides = [1, 1]} : vector<40x128xf32> to vector<1x128xf32>
    %45 = vector.extract_strided_slice %43 {offsets = [8, 0], sizes = [32, 128], strides = [1, 1]} : vector<40x128xf32> to vector<32x128xf32>
    %c0_28 = arith.constant 0 : index
    %c0_29 = arith.constant 0 : index
    %46 = vector.load %arg10[%c0_28, %c0_29] : memref<4x32xbf16, #tpu.memory_space<vmem>>, vector<4x32xbf16>
    %47 = arith.truncf %45 : vector<32x128xf32> to vector<32x128xbf16>
    %cst_30 = arith.constant dense<0.000000e+00> : vector<4x128xf32>
    %48 = tpu.matmul %46, %47, %cst_30 {dimension_numbers = #tpu.dot_dimension_numbers<[1], [0], [0], [1], [0, 0, 1, 1], [], []>} : vector<4x32xbf16>, vector<32x128xbf16>, vector<4x128xf32> -> vector<4x128xf32>
    %c0_31 = arith.constant 0 : index
    %c0_32 = arith.constant 0 : index
    %49 = vector.load %arg11[%c0_31, %c0_32] : memref<4x1xf32, #tpu.memory_space<vmem>>, vector<4x1xf32>
    %50 = vector.broadcast %49 : vector<4x1xf32> to vector<4x128xf32>
    %51 = arith.addf %48, %50 : vector<4x128xf32>
    %cst_33 = arith.constant dense<0xFF800000> : vector<128xf32>
    %52 = vector.multi_reduction <maximumf>, %51, %cst_33 [0] : vector<4x128xf32> to vector<128xf32>
    %53 = vector.shape_cast %52 : vector<128xf32> to vector<1x128xf32>
    %54 = vector.broadcast %53 : vector<1x128xf32> to vector<4x128xf32>
    %55 = arith.subf %51, %54 : vector<4x128xf32>
    %56 = math.exp %55 : vector<4x128xf32>
    %cst_34 = arith.constant dense<0.000000e+00> : vector<128xf32>
    %57 = vector.multi_reduction <add>, %56, %cst_34 [0] : vector<4x128xf32> to vector<128xf32>
    %58 = vector.shape_cast %57 : vector<128xf32> to vector<1x128xf32>
    %59 = math.log %58 : vector<1x128xf32>
    %60 = vector.broadcast %59 : vector<1x128xf32> to vector<4x128xf32>
    %61 = arith.subf %55, %60 : vector<4x128xf32>
    %cst_35 = arith.constant 0.000000e+00 : f32
    %62 = vector.broadcast %cst_35 : f32 to vector<3x128xf32>
    %63 = tpu.concatenate %44, %61, %62 in 0 : vector<1x128xf32>, vector<4x128xf32>, vector<3x128xf32> -> vector<8x128xf32>
    %c0_36 = arith.constant 0 : index
    %c0_37 = arith.constant 0 : index
    %64 = vector.load %arg12[%c0_36, %c0_37] : memref<8x128xf32, #tpu.memory_space<vmem>>, vector<8x128xf32>
    tpu.vector_store %arg12[%c0_36, %c0_37], %63 {strides = array<i32>} : memref<8x128xf32, #tpu.memory_space<vmem>>, vector<8x128xf32>,
    return
  }
  func.func @transform_0(%arg0: i32) -> (i32, i32) {
    %c0_i32 = arith.constant 0 : i32
    %c0_i32_0 = arith.constant 0 : i32
    return %arg0, %c0_i32 : i32, i32
  }
  func.func @transform_1(%arg0: i32) -> (i32, i32) {
    %c0_i32 = arith.constant 0 : i32
    %c0_i32_0 = arith.constant 0 : i32
    %c0_i32_1 = arith.constant 0 : i32
    return %c0_i32, %c0_i32_0 : i32, i32
  }
  func.func @transform_2(%arg0: i32) -> (i32, i32) {
    %c0_i32 = arith.constant 0 : i32
    %c0_i32_0 = arith.constant 0 : i32
    %c0_i32_1 = arith.constant 0 : i32
    return %c0_i32, %c0_i32_0 : i32, i32
  }
  func.func @transform_3(%arg0: i32) -> (i32, i32) {
    %c0_i32 = arith.constant 0 : i32
    %c0_i32_0 = arith.constant 0 : i32
    %c0_i32_1 = arith.constant 0 : i32
    return %c0_i32, %c0_i32_0 : i32, i32
  }
  func.func @transform_4(%arg0: i32) -> (i32, i32) {
    %c0_i32 = arith.constant 0 : i32
    %c0_i32_0 = arith.constant 0 : i32
    %c0_i32_1 = arith.constant 0 : i32
    return %c0_i32, %c0_i32_0 : i32, i32
  }
  func.func @transform_5(%arg0: i32) -> (i32, i32) {
    %c0_i32 = arith.constant 0 : i32
    %c0_i32_0 = arith.constant 0 : i32
    %c0_i32_1 = arith.constant 0 : i32
    return %c0_i32, %c0_i32_0 : i32, i32
  }
  func.func @transform_6(%arg0: i32) -> (i32, i32) {
    %c0_i32 = arith.constant 0 : i32
    %c0_i32_0 = arith.constant 0 : i32
    %c0_i32_1 = arith.constant 0 : i32
    return %c0_i32, %c0_i32_0 : i32, i32
  }
  func.func @transform_7(%arg0: i32) -> (i32, i32) {
    %c0_i32 = arith.constant 0 : i32
    %c0_i32_0 = arith.constant 0 : i32
    %c0_i32_1 = arith.constant 0 : i32
    return %c0_i32, %c0_i32_0 : i32, i32
  }
  func.func @transform_8(%arg0: i32) -> (i32, i32) {
    %c0_i32 = arith.constant 0 : i32
    %c0_i32_0 = arith.constant 0 : i32
    %c0_i32_1 = arith.constant 0 : i32
    return %c0_i32, %c0_i32_0 : i32, i32
  }
  func.func @transform_9(%arg0: i32) -> (i32, i32) {
    %c0_i32 = arith.constant 0 : i32
    %c0_i32_0 = arith.constant 0 : i32
    %c0_i32_1 = arith.constant 0 : i32
    return %c0_i32, %c0_i32_0 : i32, i32
  }
  func.func @transform_10(%arg0: i32) -> (i32, i32) {
    %c0_i32 = arith.constant 0 : i32
    %c0_i32_0 = arith.constant 0 : i32
    %c0_i32_1 = arith.constant 0 : i32
    return %c0_i32, %c0_i32_0 : i32, i32
  }
  func.func @transform_11(%arg0: i32) -> (i32, i32) {
    %c0_i32 = arith.constant 0 : i32
    %c0_i32_0 = arith.constant 0 : i32
    return %c0_i32, %arg0 : i32, i32
  }
}

</mosaic_0001>

<llo_original>
// kernel: net2048_forward.1
$region0: #{net2048_forward.1}
  #allocation0 [shape = 'u32[]', space=smem, size = 0x4, offset = 0x4, fixed_abs, tag = 'smem constant byte address 0x4 - core index']
  #allocation1 [shape = 'u32[144,128]{1,0:T(1,128)}', space=vmem, size = 0x12000, scoped, tag = 'internal scratch']
  %s0 = inlined_call_operand.vmem [shape: bf16[128,32], index: 0, kind: input, shape index: {}]
  %s1 = inlined_call_operand.vmem [shape: bf16[48,32], index: 1, kind: input, shape index: {}]
  %s2 = inlined_call_operand.vmem [shape: f32[48,1], index: 2, kind: input, shape index: {}]
  %s3 = inlined_call_operand.vmem [shape: bf16[64,48], index: 3, kind: input, shape index: {}]
  %s4 = inlined_call_operand.vmem [shape: f32[64,1], index: 4, kind: input, shape index: {}]
  %s5 = inlined_call_operand.vmem [shape: bf16[128,64], index: 5, kind: input, shape index: {}]
  %s6 = inlined_call_operand.vmem [shape: f32[128,1], index: 6, kind: input, shape index: {}]
  %s7 = inlined_call_operand.vmem [shape: bf16[40,128], index: 7, kind: input, shape index: {}]
  %s8 = inlined_call_operand.vmem [shape: f32[40,1], index: 8, kind: input, shape index: {}]
  %s9 = inlined_call_operand.vmem [shape: bf16[4,32], index: 9, kind: input, shape index: {}]
  %s10 = inlined_call_operand.vmem [shape: f32[4,1], index: 10, kind: input, shape index: {}]
  %s11 = inlined_call_operand.vmem [shape: f32[8,128], index: 11, kind: output, shape index: {}]
  %s12 = sld [smem:[#allocation0]]
  $region54: #{net2048_forward.1} parent=0
    _
  %s14 = ssub.s32 1, %s12
  %s15 = scalar_select 0, %s14, %s12
  // Predicated region
  $region2: #{net2048_forward.1} parent=0 // pred_check
    _
  $region3: #{net2048_forward.1} parent=0 // pred_check_branch
    %17 = sbr.rel (0) target = $region5
  $region4: #{net2048_forward.1} parent=0 // pred_region
    _
  $region5: #{net2048_forward.1} parent=0 // pred_fallthru
    _
  // Predicated region
  $region6: #{net2048_forward.1} parent=0 // pred_check
    _
  $region7: #{net2048_forward.1} parent=0 // pred_check_branch
    %19 = sbr.rel (0) target = $region9
  $region8: #{net2048_forward.1} parent=0 // pred_region
    _
  $region9: #{net2048_forward.1} parent=0 // pred_fallthru
    _
  // Predicated region
  $region10: #{net2048_forward.1} parent=0 // pred_check
    _
  $region11: #{net2048_forward.1} parent=0 // pred_check_branch
    %21 = sbr.rel (0) target = $region13
  $region12: #{net2048_forward.1} parent=0 // pred_region
    _
  $region13: #{net2048_forward.1} parent=0 // pred_fallthru
    _
  // Predicated region
  $region14: #{net2048_forward.1} parent=0 // pred_check
    _
  $region15: #{net2048_forward.1} parent=0 // pred_check_branch
    %23 = sbr.rel (0) target = $region17
  $region16: #{net2048_forward.1} parent=0 // pred_region
    _
  $region17: #{net2048_forward.1} parent=0 // pred_fallthru
    _
  // Predicated region
  $region18: #{net2048_forward.1} parent=0 // pred_check
    _
  $region19: #{net2048_forward.1} parent=0 // pred_check_branch
    %25 = sbr.rel (0) target = $region21
  $region20: #{net2048_forward.1} parent=0 // pred_region
    _
  $region21: #{net2048_forward.1} parent=0 // pred_fallthru
    _
  // Predicated region
  $region22: #{net2048_forward.1} parent=0 // pred_check
    _
  $region23: #{net2048_forward.1} parent=0 // pred_check_branch
    %27 = sbr.rel (0) target = $region25
  $region24: #{net2048_forward.1} parent=0 // pred_region
    _
  $region25: #{net2048_forward.1} parent=0 // pred_fallthru
    _
  // Predicated region
  $region26: #{net2048_forward.1} parent=0 // pred_check
    _
  $region27: #{net2048_forward.1} parent=0 // pred_check_branch
    %29 = sbr.rel (0) target = $region29
  $region28: #{net2048_forward.1} parent=0 // pred_region
    _
  $region29: #{net2048_forward.1} parent=0 // pred_fallthru
    _
  // Predicated region
  $region30: #{net2048_forward.1} parent=0 // pred_check
    _
  $region31: #{net2048_forward.1} parent=0 // pred_check_branch
    %31 = sbr.rel (0) target = $region33
  $region32: #{net2048_forward.1} parent=0 // pred_region
    _
  $region33: #{net2048_forward.1} parent=0 // pred_fallthru
    _
  // Predicated region
  $region34: #{net2048_forward.1} parent=0 // pred_check
    _
  $region35: #{net2048_forward.1} parent=0 // pred_check_branch
    %33 = sbr.rel (0) target = $region37
  $region36: #{net2048_forward.1} parent=0 // pred_region
    _
  $region37: #{net2048_forward.1} parent=0 // pred_fallthru
    _
  // Predicated region
  $region38: #{net2048_forward.1} parent=0 // pred_check
    _
  $region39: #{net2048_forward.1} parent=0 // pred_check_branch
    %35 = sbr.rel (0) target = $region41
  $region40: #{net2048_forward.1} parent=0 // pred_region
    _
  $region41: #{net2048_forward.1} parent=0 // pred_fallthru
    _
  // Predicated region
  $region42: #{net2048_forward.1} parent=0 // pred_check
    _
  $region43: #{net2048_forward.1} parent=0 // pred_check_branch
    %37 = sbr.rel (0) target = $region45
  $region44: #{net2048_forward.1} parent=0 // pred_region
    _
  $region45: #{net2048_forward.1} parent=0 // pred_fallthru
    _
  %v39 = vld [vmem:[%s1] sm:$0xf]
  %v40 = vld [vmem:[%s1 + $0x4] sm:$0xf]
  %v41 = vld [vmem:[%s1 + $0x8] sm:$0xf]
  %v42 = vld [vmem:[%s1 + $0xc] sm:$0xf]
  %v43 = vld [vmem:[%s1 + $0x10] sm:$0xf]
  %v44 = vld [vmem:[%s1 + $0x14] sm:$0xf]
  %v45 = vld [vmem:[%s0] sm:$0xf]
  %v46 = vld [vmem:[%s0 + $0x4] sm:$0xf]
  %v47 = vld [vmem:[%s0 + $0x8] sm:$0xf]
  %v48 = vld [vmem:[%s0 + $0xc] sm:$0xf]
  %v49 = vld [vmem:[%s0 + $0x10] sm:$0xf]
  %v50 = vld [vmem:[%s0 + $0x14] sm:$0xf]
  %v51 = vld [vmem:[%s0 + $0x18] sm:$0xf]
  %v52 = vld [vmem:[%s0 + $0x1c] sm:$0xf]
  %v53 = vld [vmem:[%s0 + $0x20] sm:$0xf]
  %v54 = vld [vmem:[%s0 + $0x24] sm:$0xf]
  %v55 = vld [vmem:[%s0 + $0x28] sm:$0xf]
  %v56 = vld [vmem:[%s0 + $0x2c] sm:$0xf]
  %v57 = vld [vmem:[%s0 + $0x30] sm:$0xf]
  %v58 = vld [vmem:[%s0 + $0x34] sm:$0xf]
  %v59 = vld [vmem:[%s0 + $0x38] sm:$0xf]
  %v60 = vld [vmem:[%s0 + $0x3c] sm:$0xf]
  %v61 = vld [vmem:[%s2] sm:$0xff]
  %v62 = vld [vmem:[%s2 + $0x8] sm:$0xff]
  %v63 = vld [vmem:[%s2 + $0x10] sm:$0xff]
  %v64 = vld [vmem:[%s2 + $0x18] sm:$0xff]
  %v65 = vld [vmem:[%s2 + $0x20] sm:$0xff]
  %v66 = vld [vmem:[%s2 + $0x28] sm:$0xff]
  %68 = vset.pattern.permute.xlu0 0
  %69 = vperm.xlu0 %68, %v61
  %v70 = vpop.permute.xlu0 %69
  %73 = vset.pattern.permute.xlu0 0
  %74 = vperm.xlu0 %73, %v62
  %v75 = vpop.permute.xlu0 %74
  %78 = vset.pattern.permute.xlu0 0
  %79 = vperm.xlu0 %78, %v63
  %v80 = vpop.permute.xlu0 %79
  %83 = vset.pattern.permute.xlu0 0
  %84 = vperm.xlu0 %83, %v64
  %v85 = vpop.permute.xlu0 %84
  %88 = vset.pattern.permute.xlu0 0
  %89 = vperm.xlu0 %88, %v65
  %v90 = vpop.permute.xlu0 %89
  %93 = vset.pattern.permute.xlu0 0
  %94 = vperm.xlu0 %93, %v66
  %v95 = vpop.permute.xlu0 %94
  %v103 = vunpack.c.l.b16 %v39
  %v104 = vunpack.c.l.b16 %v40
  %v105 = vunpack.c.l.b16 %v41
  %v106 = vunpack.c.l.b16 %v42
  %v107 = vunpack.c.l.b16 %v43
  %v108 = vunpack.c.l.b16 %v44
  %v109 = vpack.c.b16 %v104, %v103
  %v110 = vpack.c.b16 %v106, %v105
  %v111 = vpack.c.b16 %v108, %v107
  %v128 = vunpack.c.l.b16 %v45
  %v129 = vunpack.c.l.b16 %v46
  %v130 = vunpack.c.l.b16 %v47
  %v131 = vunpack.c.l.b16 %v48
  %v132 = vunpack.c.l.b16 %v49
  %v133 = vunpack.c.l.b16 %v50
  %v134 = vunpack.c.l.b16 %v51
  %v135 = vunpack.c.l.b16 %v52
  %v136 = vunpack.c.l.b16 %v53
  %v137 = vunpack.c.l.b16 %v54
  %v138 = vunpack.c.l.b16 %v55
  %v139 = vunpack.c.l.b16 %v56
  %v140 = vunpack.c.l.b16 %v57
  %v141 = vunpack.c.l.b16 %v58
  %v142 = vunpack.c.l.b16 %v59
  %v143 = vunpack.c.l.b16 %v60
  %v144 = vpack.c.b16 %v129, %v128
  %v145 = vpack.c.b16 %v131, %v130
  %v146 = vpack.c.b16 %v133, %v132
  %v147 = vpack.c.b16 %v135, %v134
  %v148 = vpack.c.b16 %v137, %v136
  %v149 = vpack.c.b16 %v139, %v138
  %v150 = vpack.c.b16 %v141, %v140
  %v151 = vpack.c.b16 %v143, %v142
  %vm152 = vcmask 261120
  %v154 = vsel %vm152, %v109, 0
  %v157 = vsel %vm152, %v110, 0
  %v160 = vsel %vm152, %v111, 0
  %v163 = vsel %vm152, %v144, 0
  %v166 = vsel %vm152, %v145, 0
  %v169 = vsel %vm152, %v146, 0
  %v172 = vsel %vm152, %v147, 0
  %v175 = vsel %vm152, %v148, 0
  %v178 = vsel %vm152, %v149, 0
  %v181 = vsel %vm152, %v150, 0
  %v184 = vsel %vm152, %v151, 0
  %186 = vmatprep.subr.bf16.mxu0 0
  %187 = vmatpush1.bf16.xpose.msra.mxu0 %v163
  %188 = vmatprep.subr.bf16.mxu0 0
  %189 = vmatpush1.bf16.xpose.msra.mxu0 %v166
  %190 = vmatprep.subr.bf16.mxu0 0
  %191 = vmatpush1.bf16.xpose.msra.mxu0 %v169
  %192 = vmatprep.subr.bf16.mxu0 0
  %193 = vmatpush1.bf16.xpose.msra.mxu0 %v172
  %194 = vmatprep.subr.bf16.mxu0 0
  %195 = vmatpush1.bf16.xpose.msra.mxu0 %v175
  %196 = vmatprep.subr.bf16.mxu0 0
  %197 = vmatpush1.bf16.xpose.msra.mxu0 %v178
  %198 = vmatprep.subr.bf16.mxu0 0
  %199 = vmatpush1.bf16.xpose.msra.mxu0 %v181
  %200 = vmatprep.subr.bf16.mxu0 0
  %201 = vmatpush1.bf16.xpose.msra.mxu0 %v184
  %202 = vmatprep.subr.bf16.mxu0 0
  %203 = vmatpush1.bf16.xpose.msra.mxu0 0
  %204 = vmatprep.subr.bf16.mxu0 0
  %205 = vmatpush1.bf16.xpose.msra.mxu0 0
  %206 = vmatprep.subr.bf16.mxu0 0
  %207 = vmatpush1.bf16.xpose.msra.mxu0 0
  %208 = vmatprep.subr.bf16.mxu0 0
  %209 = vmatpush1.bf16.xpose.msra.mxu0 0
  %210 = vmatprep.subr.bf16.mxu0 0
  %211 = vmatpush1.bf16.xpose.msra.mxu0 0
  %212 = vmatprep.subr.bf16.mxu0 0
  %213 = vmatpush1.bf16.xpose.msra.mxu0 0
  %214 = vmatprep.subr.bf16.mxu0 0
  %215 = vmatpush1.bf16.xpose.msra.mxu0 0
  %216 = vmatprep.subr.bf16.mxu0 0
  %217 = vmatpush1.bf16.xpose.msra.mxu0 0
  %218 = vmatprep.mubr.bf16.mxu0 0
  %219 = vmatmul.mubr.bf16.gmra.mrb[0].mxu0 %v154
  %v220 = vpop.f32.mrb[0].mxu0
  %v221 = vadd.f32 %v70, %v220
  %v222 = vpop.f32.mrb[0].mxu0
  %v223 = vpop.f32.mrb[0].mxu0
  %v224 = vadd.f32 %v75, %v223
  %v225 = vpop.f32.mrb[0].mxu0
  %226 = vmatprep.mubr.bf16.mxu0 0
  %227 = vmatmul.mubr.bf16.gmra.mrb[0].mxu0 %v157
  %v228 = vpop.f32.mrb[0].mxu0
  %v229 = vadd.f32 %v80, %v228
  %v230 = vpop.f32.mrb[0].mxu0
  %v231 = vpop.f32.mrb[0].mxu0
  %v232 = vadd.f32 %v85, %v231
  %v233 = vpop.f32.mrb[0].mxu0
  %234 = vmatprep.mubr.bf16.mxu0 0
  %235 = vmatmul.mubr.bf16.gmra.mrb[0].mxu0 %v160
  %v236 = vpop.f32.mrb[0].mxu0
  %v237 = vadd.f32 %v90, %v236
  %v238 = vpop.f32.mrb[0].mxu0
  %v239 = vpop.f32.mrb[0].mxu0
  %v240 = vadd.f32 %v95, %v239
  %v241 = vpop.f32.mrb[0].mxu0
  %242 = vdwg.mxu0
  %vm243 = vcmp.gt.f32.partialorder %v221, 0.0
  %vm244 = vcmp.gt.f32.partialorder %v224, 0.0
  %vm245 = vcmp.gt.f32.partialorder %v229, 0.0
  %vm246 = vcmp.gt.f32.partialorder %v232, 0.0
  %vm247 = vcmp.gt.f32.partialorder %v237, 0.0
  %vm248 = vcmp.gt.f32.partialorder %v240, 0.0
  %v249 = vmul.f32 %v221, 0.01
  %v250 = vmul.f32 %v224, 0.01
  %v251 = vmul.f32 %v229, 0.01
  %v252 = vmul.f32 %v232, 0.01
  %v253 = vmul.f32 %v237, 0.01
  %v254 = vmul.f32 %v240, 0.01
  %v255 = vsel %vm243, %v221, %v249
  %v256 = vsel %vm244, %v224, %v250
  %v257 = vsel %vm245, %v229, %v251
  %v258 = vsel %vm246, %v232, %v252
  %v259 = vsel %vm247, %v237, %v253
  %v260 = vsel %vm248, %v240, %v254
  %v261 = vld [vmem:[%s3] sm:$0xf]
  %v262 = vld [vmem:[%s3 + $0x4] sm:$0xf]
  %v263 = vld [vmem:[%s3 + $0x8] sm:$0xf]
  %v264 = vld [vmem:[%s3 + $0xc] sm:$0xf]
  %v265 = vld [vmem:[%s3 + $0x10] sm:$0xf]
  %v266 = vld [vmem:[%s3 + $0x14] sm:$0xf]
  %v267 = vld [vmem:[%s3 + $0x18] sm:$0xf]
  %v268 = vld [vmem:[%s3 + $0x1c] sm:$0xf]
  %v269 = vpack.c.bf16 %v256, %v255
  %v270 = vpack.c.bf16 %v258, %v257
  %v271 = vpack.c.bf16 %v260, %v259
  %v272 = vld [vmem:[%s4] sm:$0xff]
  %v273 = vld [vmem:[%s4 + $0x8] sm:$0xff]
  %v274 = vld [vmem:[%s4 + $0x10] sm:$0xff]
  %v275 = vld [vmem:[%s4 + $0x18] sm:$0xff]
  %v276 = vld [vmem:[%s4 + $0x20] sm:$0xff]
  %v277 = vld [vmem:[%s4 + $0x28] sm:$0xff]
  %v278 = vld [vmem:[%s4 + $0x30] sm:$0xff]
  %v279 = vld [vmem:[%s4 + $0x38] sm:$0xff]
  %281 = vset.pattern.permute.xlu0 0
  %282 = vperm.xlu0 %281, %v272
  %v283 = vpop.permute.xlu0 %282
  %286 = vset.pattern.permute.xlu0 0
  %287 = vperm.xlu0 %286, %v273
  %v288 = vpop.permute.xlu0 %287
  %291 = vset.pattern.permute.xlu0 0
  %292 = vperm.xlu0 %291, %v274
  %v293 = vpop.permute.xlu0 %292
  %296 = vset.pattern.permute.xlu0 0
  %297 = vperm.xlu0 %296, %v275
  %v298 = vpop.permute.xlu0 %297
  %301 = vset.pattern.permute.xlu0 0
  %302 = vperm.xlu0 %301, %v276
  %v303 = vpop.permute.xlu0 %302
  %306 = vset.pattern.permute.xlu0 0
  %307 = vperm.xlu0 %306, %v277
  %v308 = vpop.permute.xlu0 %307
  %311 = vset.pattern.permute.xlu0 0
  %312 = vperm.xlu0 %311, %v278
  %v313 = vpop.permute.xlu0 %312
  %316 = vset.pattern.permute.xlu0 0
  %317 = vperm.xlu0 %316, %v279
  %v318 = vpop.permute.xlu0 %317
  %v328 = vunpack.c.l.b16 %v261
  %v329 = vunpack.c.l.b16 %v262
  %v330 = vunpack.c.l.b16 %v263
  %v331 = vunpack.c.l.b16 %v264
  %v332 = vunpack.c.l.b16 %v265
  %v333 = vunpack.c.l.b16 %v266
  %v334 = vunpack.c.l.b16 %v267
  %v335 = vunpack.c.l.b16 %v268
  %v336 = vpack.c.b16 %v329, %v328
  %v337 = vpack.c.b16 %v331, %v330
  %v338 = vpack.c.b16 %v333, %v332
  %v339 = vpack.c.b16 %v335, %v334
  %vm340 = vcmask 392192
  %v342 = vsel %vm340, %v336, 0
  %v345 = vsel %vm340, %v337, 0
  %v348 = vsel %vm340, %v338, 0
  %v351 = vsel %vm340, %v339, 0
  %353 = vmatprep.subr.bf16.mxu0 0
  %354 = vmatpush1.bf16.msra.mxu0 %v269
  %355 = vmatprep.subr.bf16.mxu0 0
  %356 = vmatpush1.bf16.msra.mxu0 %v270
  %357 = vmatprep.subr.bf16.mxu0 0
  %358 = vmatpush1.bf16.msra.mxu0 %v271
  %359 = vmatprep.subr.bf16.mxu0 0
  %360 = vmatpush1.bf16.msra.mxu0 0
  %361 = vmatprep.subr.bf16.mxu0 0
  %362 = vmatpush1.bf16.msra.mxu0 0
  %363 = vmatprep.subr.bf16.mxu0 0
  %364 = vmatpush1.bf16.msra.mxu0 0
  %365 = vmatprep.subr.bf16.mxu0 0
  %366 = vmatpush1.bf16.msra.mxu0 0
  %367 = vmatprep.subr.bf16.mxu0 0
  %368 = vmatpush1.bf16.msra.mxu0 0
  %369 = vmatprep.subr.bf16.mxu0 0
  %370 = vmatpush1.bf16.msra.mxu0 0
  %371 = vmatprep.subr.bf16.mxu0 0
  %372 = vmatpush1.bf16.msra.mxu0 0
  %373 = vmatprep.subr.bf16.mxu0 0
  %374 = vmatpush1.bf16.msra.mxu0 0
  %375 = vmatprep.subr.bf16.mxu0 0
  %376 = vmatpush1.bf16.msra.mxu0 0
  %377 = vmatprep.subr.bf16.mxu0 0
  %378 = vmatpush1.bf16.msra.mxu0 0
  %379 = vmatprep.subr.bf16.mxu0 0
  %380 = vmatpush1.bf16.msra.mxu0 0
  %381 = vmatprep.subr.bf16.mxu0 0
  %382 = vmatpush1.bf16.msra.mxu0 0
  %383 = vmatprep.subr.bf16.mxu0 0
  %384 = vmatpush1.bf16.msra.mxu0 0
  %385 = vmatprep.mubr.bf16.mxu0 0
  %386 = vmatmul.mubr.bf16.gmra.mrb[0].mxu0 %v342
  %v387 = vpop.f32.mrb[0].mxu0
  %v388 = vadd.f32 %v283, %v387
  %v389 = vpop.f32.mrb[0].mxu0
  %v390 = vpop.f32.mrb[0].mxu0
  %v391 = vadd.f32 %v288, %v390
  %v392 = vpop.f32.mrb[0].mxu0
  %393 = vmatprep.mubr.bf16.mxu0 0
  %394 = vmatmul.mubr.bf16.gmra.mrb[0].mxu0 %v345
  %v395 = vpop.f32.mrb[0].mxu0
  %v396 = vadd.f32 %v293, %v395
  %v397 = vpop.f32.mrb[0].mxu0
  %v398 = vpop.f32.mrb[0].mxu0
  %v399 = vadd.f32 %v298, %v398
  %v400 = vpop.f32.mrb[0].mxu0
  %401 = vmatprep.mubr.bf16.mxu0 0
  %402 = vmatmul.mubr.bf16.gmra.mrb[0].mxu0 %v348
  %v403 = vpop.f32.mrb[0].mxu0
  %v404 = vadd.f32 %v303, %v403
  %v405 = vpop.f32.mrb[0].mxu0
  %v406 = vpop.f32.mrb[0].mxu0
  %v407 = vadd.f32 %v308, %v406
  %v408 = vpop.f32.mrb[0].mxu0
  %409 = vmatprep.mubr.bf16.mxu0 0
  %410 = vmatmul.mubr.bf16.gmra.mrb[0].mxu0 %v351
  %v411 = vpop.f32.mrb[0].mxu0
  %v412 = vadd.f32 %v313, %v411
  %v413 = vpop.f32.mrb[0].mxu0
  %v414 = vpop.f32.mrb[0].mxu0
  %v415 = vadd.f32 %v318, %v414
  %v416 = vpop.f32.mrb[0].mxu0
  %417 = vdwg.mxu0
  %vm418 = vcmp.gt.f32.partialorder %v388, 0.0
  %vm419 = vcmp.gt.f32.partialorder %v391, 0.0
  %vm420 = vcmp.gt.f32.partialorder %v396, 0.0
  %vm421 = vcmp.gt.f32.partialorder %v399, 0.0
  %vm422 = vcmp.gt.f32.partialorder %v404, 0.0
  %vm423 = vcmp.gt.f32.partialorder %v407, 0.0
  %vm424 = vcmp.gt.f32.partialorder %v412, 0.0
  %vm425 = vcmp.gt.f32.partialorder %v415, 0.0
  %v426 = vmul.f32 %v388, 0.01
  %v427 = vmul.f32 %v391, 0.01
  %v428 = vmul.f32 %v396, 0.01
  %v429 = vmul.f32 %v399, 0.01
  %v430 = vmul.f32 %v404, 0.01
  %v431 = vmul.f32 %v407, 0.01
  %v432 = vmul.f32 %v412, 0.01
  %v433 = vmul.f32 %v415, 0.01
  %v434 = vsel %vm418, %v388, %v426
  %v435 = vsel %vm419, %v391, %v427
  %v436 = vsel %vm420, %v396, %v428
  %v437 = vsel %vm421, %v399, %v429
  %v438 = vsel %vm422, %v404, %v430
  %v439 = vsel %vm423, %v407, %v431
  %v440 = vsel %vm424, %v412, %v432
  %v441 = vsel %vm425, %v415, %v433
  %v442 = vld [vmem:[%s5] sm:$0xf]
  %v443 = vld [vmem:[%s5 + $0x4] sm:$0xf]
  %v444 = vld [vmem:[%s5 + $0x8] sm:$0xf]
  %v445 = vld [vmem:[%s5 + $0xc] sm:$0xf]
  %v446 = vld [vmem:[%s5 + $0x10] sm:$0xf]
  %v447 = vld [vmem:[%s5 + $0x14] sm:$0xf]
  %v448 = vld [vmem:[%s5 + $0x18] sm:$0xf]
  %v449 = vld [vmem:[%s5 + $0x1c] sm:$0xf]
  %v450 = vld [vmem:[%s5 + $0x20] sm:$0xf]
  %v451 = vld [vmem:[%s5 + $0x24] sm:$0xf]
  %v452 = vld [vmem:[%s5 + $0x28] sm:$0xf]
  %v453 = vld [vmem:[%s5 + $0x2c] sm:$0xf]
  %v454 = vld [vmem:[%s5 + $0x30] sm:$0xf]
  %v455 = vld [vmem:[%s5 + $0x34] sm:$0xf]
  %v456 = vld [vmem:[%s5 + $0x38] sm:$0xf]
  %v457 = vld [vmem:[%s5 + $0x3c] sm:$0xf]
  %v458 = vpack.c.bf16 %v435, %v434
  %v459 = vpack.c.bf16 %v437, %v436
  %v460 = vpack.c.bf16 %v439, %v438
  %v461 = vpack.c.bf16 %v441, %v440
  %v462 = vld [vmem:[%s6] sm:$0xff]
  %v463 = vld [vmem:[%s6 + $0x8] sm:$0xff]
  %v464 = vld [vmem:[%s6 + $0x10] sm:$0xff]
  %v465 = vld [vmem:[%s6 + $0x18] sm:$0xff]
  %v466 = vld [vmem:[%s6 + $0x20] sm:$0xff]
  %v467 = vld [vmem:[%s6 + $0x28] sm:$0xff]
  %v468 = vld [vmem:[%s6 + $0x30] sm:$0xff]
  %v469 = vld [vmem:[%s6 + $0x38] sm:$0xff]
  %v470 = vld [vmem:[%s6 + $0x40] sm:$0xff]
  %v471 = vld [vmem:[%s6 + $0x48] sm:$0xff]
  %v472 = vld [vmem:[%s6 + $0x50] sm:$0xff]
  %v473 = vld [vmem:[%s6 + $0x58] sm:$0xff]
  %v474 = vld [vmem:[%s6 + $0x60] sm:$0xff]
  %v475 = vld [vmem:[%s6 + $0x68] sm:$0xff]
  %v476 = vld [vmem:[%s6 + $0x70] sm:$0xff]
  %v477 = vld [vmem:[%s6 + $0x78] sm:$0xff]
  %479 = vset.pattern.permute.xlu0 0
  %480 = vperm.xlu0 %479, %v462
  %v481 = vpop.permute.xlu0 %480
  %484 = vset.pattern.permute.xlu0 0
  %485 = vperm.xlu0 %484, %v463
  %v486 = vpop.permute.xlu0 %485
  %489 = vset.pattern.permute.xlu0 0
  %490 = vperm.xlu0 %489, %v464
  %v491 = vpop.permute.xlu0 %490
  %494 = vset.pattern.permute.xlu0 0
  %495 = vperm.xlu0 %494, %v465
  %v496 = vpop.permute.xlu0 %495
  %499 = vset.pattern.permute.xlu0 0
  %500 = vperm.xlu0 %499, %v466
  %v501 = vpop.permute.xlu0 %500
  %504 = vset.pattern.permute.xlu0 0
  %505 = vperm.xlu0 %504, %v467
  %v506 = vpop.permute.xlu0 %505
  %509 = vset.pattern.permute.xlu0 0
  %510 = vperm.xlu0 %509, %v468
  %v511 = vpop.permute.xlu0 %510
  %514 = vset.pattern.permute.xlu0 0
  %515 = vperm.xlu0 %514, %v469
  %v516 = vpop.permute.xlu0 %515
  %519 = vset.pattern.permute.xlu0 0
  %520 = vperm.xlu0 %519, %v470
  %v521 = vpop.permute.xlu0 %520
  %524 = vset.pattern.permute.xlu0 0
  %525 = vperm.xlu0 %524, %v471
  %v526 = vpop.permute.xlu0 %525
  %529 = vset.pattern.permute.xlu0 0
  %530 = vperm.xlu0 %529, %v472
  %v531 = vpop.permute.xlu0 %530
  %534 = vset.pattern.permute.xlu0 0
  %535 = vperm.xlu0 %534, %v473
  %v536 = vpop.permute.xlu0 %535
  %539 = vset.pattern.permute.xlu0 0
  %540 = vperm.xlu0 %539, %v474
  %v541 = vpop.permute.xlu0 %540
  %544 = vset.pattern.permute.xlu0 0
  %545 = vperm.xlu0 %544, %v475
  %v546 = vpop.permute.xlu0 %545
  %549 = vset.pattern.permute.xlu0 0
  %550 = vperm.xlu0 %549, %v476
  %v551 = vpop.permute.xlu0 %550
  %554 = vset.pattern.permute.xlu0 0
  %555 = vperm.xlu0 %554, %v477
  %v556 = vpop.permute.xlu0 %555
  %v574 = vunpack.c.l.b16 %v442
  %v575 = vunpack.c.l.b16 %v443
  %v576 = vunpack.c.l.b16 %v444
  %v577 = vunpack.c.l.b16 %v445
  %v578 = vunpack.c.l.b16 %v446
  %v579 = vunpack.c.l.b16 %v447
  %v580 = vunpack.c.l.b16 %v448
  %v581 = vunpack.c.l.b16 %v449
  %v582 = vunpack.c.l.b16 %v450
  %v583 = vunpack.c.l.b16 %v451
  %v584 = vunpack.c.l.b16 %v452
  %v585 = vunpack.c.l.b16 %v453
  %v586 = vunpack.c.l.b16 %v454
  %v587 = vunpack.c.l.b16 %v455
  %v588 = vunpack.c.l.b16 %v456
  %v589 = vunpack.c.l.b16 %v457
  %v590 = vpack.c.b16 %v575, %v574
  %v591 = vpack.c.b16 %v577, %v576
  %v592 = vpack.c.b16 %v579, %v578
  %v593 = vpack.c.b16 %v581, %v580
  %v594 = vpack.c.b16 %v583, %v582
  %v595 = vpack.c.b16 %v585, %v584
  %v596 = vpack.c.b16 %v587, %v586
  %v597 = vpack.c.b16 %v589, %v588
  %vm598 = vcmask 523264
  %v600 = vsel %vm598, %v590, 0
  %v603 = vsel %vm598, %v591, 0
  %v606 = vsel %vm598, %v592, 0
  %v609 = vsel %vm598, %v593, 0
  %v612 = vsel %vm598, %v594, 0
  %v615 = vsel %vm598, %v595, 0
  %v618 = vsel %vm598, %v596, 0
  %v621 = vsel %vm598, %v597, 0
  %623 = vmatprep.subr.bf16.mxu0 0
  %624 = vmatpush1.bf16.msra.mxu0 %v458
  %625 = vmatprep.subr.bf16.mxu0 0
  %626 = vmatpush1.bf16.msra.mxu0 %v459
  %627 = vmatprep.subr.bf16.mxu0 0
  %628 = vmatpush1.bf16.msra.mxu0 %v460
  %629 = vmatprep.subr.bf16.mxu0 0
  %630 = vmatpush1.bf16.msra.mxu0 %v461
  %631 = vmatprep.subr.bf16.mxu0 0
  %632 = vmatpush1.bf16.msra.mxu0 0
  %633 = vmatprep.subr.bf16.mxu0 0
  %634 = vmatpush1.bf16.msra.mxu0 0
  %635 = vmatprep.subr.bf16.mxu0 0
  %636 = vmatpush1.bf16.msra.mxu0 0
  %637 = vmatprep.subr.bf16.mxu0 0
  %638 = vmatpush1.bf16.msra.mxu0 0
  %639 = vmatprep.subr.bf16.mxu0 0
  %640 = vmatpush1.bf16.msra.mxu0 0
  %641 = vmatprep.subr.bf16.mxu0 0
  %642 = vmatpush1.bf16.msra.mxu0 0
  %643 = vmatprep.subr.bf16.mxu0 0
  %644 = vmatpush1.bf16.msra.mxu0 0
  %645 = vmatprep.subr.bf16.mxu0 0
  %646 = vmatpush1.bf16.msra.mxu0 0
  %647 = vmatprep.subr.bf16.mxu0 0
  %648 = vmatpush1.bf16.msra.mxu0 0
  %649 = vmatprep.subr.bf16.mxu0 0
  %650 = vmatpush1.bf16.msra.mxu0 0
  %651 = vmatprep.subr.bf16.mxu0 0
  %652 = vmatpush1.bf16.msra.mxu0 0
  %653 = vmatprep.subr.bf16.mxu0 0
  %654 = vmatpush1.bf16.msra.mxu0 0
  %655 = vmatprep.mubr.bf16.mxu0 0
  %656 = vmatmul.mubr.bf16.gmra.mrb[0].mxu0 %v600
  %v657 = vpop.f32.mrb[0].mxu0
  %v658 = vadd.f32 %v481, %v657
  %v659 = vpop.f32.mrb[0].mxu0
  %v660 = vpop.f32.mrb[0].mxu0
  %v661 = vadd.f32 %v486, %v660
  %v662 = vpop.f32.mrb[0].mxu0
  %663 = vmatprep.mubr.bf16.mxu0 0
  %664 = vmatmul.mubr.bf16.gmra.mrb[0].mxu0 %v603
  %v665 = vpop.f32.mrb[0].mxu0
  %v666 = vadd.f32 %v491, %v665
  %v667 = vpop.f32.mrb[0].mxu0
  %v668 = vpop.f32.mrb[0].mxu0
  %v669 = vadd.f32 %v496, %v668
  %v670 = vpop.f32.mrb[0].mxu0
  %671 = vmatprep.mubr.bf16.mxu0 0
  %672 = vmatmul.mubr.bf16.gmra.mrb[0].mxu0 %v606
  %v673 = vpop.f32.mrb[0].mxu0
  %v674 = vadd.f32 %v501, %v673
  %v675 = vpop.f32.mrb[0].mxu0
  %v676 = vpop.f32.mrb[0].mxu0
  %v677 = vadd.f32 %v506, %v676
  %v678 = vpop.f32.mrb[0].mxu0
  %679 = vmatprep.mubr.bf16.mxu0 0
  %680 = vmatmul.mubr.bf16.gmra.mrb[0].mxu0 %v609
  %v681 = vpop.f32.mrb[0].mxu0
  %v682 = vadd.f32 %v511, %v681
  %v683 = vpop.f32.mrb[0].mxu0
  %v684 = vpop.f32.mrb[0].mxu0
  %v685 = vadd.f32 %v516, %v684
  %v686 = vpop.f32.mrb[0].mxu0
  %687 = vmatprep.mubr.bf16.mxu0 0
  %688 = vmatmul.mubr.bf16.gmra.mrb[0].mxu0 %v612
  %v689 = vpop.f32.mrb[0].mxu0
  %v690 = vadd.f32 %v521, %v689
  %v691 = vpop.f32.mrb[0].mxu0
  %v692 = vpop.f32.mrb[0].mxu0
  %v693 = vadd.f32 %v526, %v692
  %v694 = vpop.f32.mrb[0].mxu0
  %695 = vmatprep.mubr.bf16.mxu0 0
  %696 = vmatmul.mubr.bf16.gmra.mrb[0].mxu0 %v615
  %v697 = vpop.f32.mrb[0].mxu0
  %v698 = vadd.f32 %v531, %v697
  %v699 = vpop.f32.mrb[0].mxu0
  %v700 = vpop.f32.mrb[0].mxu0
  %v701 = vadd.f32 %v536, %v700
  %v702 = vpop.f32.mrb[0].mxu0
  %703 = vmatprep.mubr.bf16.mxu0 0
  %704 = vmatmul.mubr.bf16.gmra.mrb[0].mxu0 %v618
  %v705 = vpop.f32.mrb[0].mxu0
  %v706 = vadd.f32 %v541, %v705
  %v707 = vpop.f32.mrb[0].mxu0
  %v708 = vpop.f32.mrb[0].mxu0
  %v709 = vadd.f32 %v546, %v708
  %v710 = vpop.f32.mrb[0].mxu0
  %711 = vmatprep.mubr.bf16.mxu0 0
  %712 = vmatmul.mubr.bf16.gmra.mrb[0].mxu0 %v621
  %v713 = vpop.f32.mrb[0].mxu0
  %v714 = vadd.f32 %v551, %v713
  %v715 = vpop.f32.mrb[0].mxu0
  %v716 = vpop.f32.mrb[0].mxu0
  %v717 = vadd.f32 %v556, %v716
  %v718 = vpop.f32.mrb[0].mxu0
  %719 = vdwg.mxu0
  %vm720 = vcmp.gt.f32.partialorder %v658, 0.0
  %vm721 = vcmp.gt.f32.partialorder %v661, 0.0
  %vm722 = vcmp.gt.f32.partialorder %v666, 0.0
  %vm723 = vcmp.gt.f32.partialorder %v669, 0.0
  %vm724 = vcmp.gt.f32.partialorder %v674, 0.0
  %vm725 = vcmp.gt.f32.partialorder %v677, 0.0
  %vm726 = vcmp.gt.f32.partialorder %v682, 0.0
  %vm727 = vcmp.gt.f32.partialorder %v685, 0.0
  %vm728 = vcmp.gt.f32.partialorder %v690, 0.0
  %vm729 = vcmp.gt.f32.partialorder %v693, 0.0
  %vm730 = vcmp.gt.f32.partialorder %v698, 0.0
  %vm731 = vcmp.gt.f32.partialorder %v701, 0.0
  %vm732 = vcmp.gt.f32.partialorder %v706, 0.0
  %vm733 = vcmp.gt.f32.partialorder %v709, 0.0
  %vm734 = vcmp.gt.f32.partialorder %v714, 0.0
  %vm735 = vcmp.gt.f32.partialorder %v717, 0.0
  %v736 = vmul.f32 %v658, 0.01
  %v737 = vmul.f32 %v661, 0.01
  %v738 = vmul.f32 %v666, 0.01
  %v739 = vmul.f32 %v669, 0.01
  %v740 = vmul.f32 %v674, 0.01
  %v741 = vmul.f32 %v677, 0.01
  %v742 = vmul.f32 %v682, 0.01
  %v743 = vmul.f32 %v685, 0.01
  %v744 = vmul.f32 %v690, 0.01
  %v745 = vmul.f32 %v693, 0.01
  %v746 = vmul.f32 %v698, 0.01
  %v747 = vmul.f32 %v701, 0.01
  %v748 = vmul.f32 %v706, 0.01
  %v749 = vmul.f32 %v709, 0.01
  %v750 = vmul.f32 %v714, 0.01
  %v751 = vmul.f32 %v717, 0.01
  %v752 = vsel %vm720, %v658, %v736
  %v753 = vsel %vm721, %v661, %v737
  %v754 = vsel %vm722, %v666, %v738
  %v755 = vsel %vm723, %v669, %v739
  %v756 = vsel %vm724, %v674, %v740
  %v757 = vsel %vm725, %v677, %v741
  %v758 = vsel %vm726, %v682, %v742
  %v759 = vsel %vm727, %v685, %v743
  %v760 = vsel %vm728, %v690, %v744
  %v761 = vsel %vm729, %v693, %v745
  %v762 = vsel %vm730, %v698, %v746
  %v763 = vsel %vm731, %v701, %v747
  %v764 = vsel %vm732, %v706, %v748
  %v765 = vsel %vm733, %v709, %v749
  %v766 = vsel %vm734, %v714, %v750
  %v767 = vsel %vm735, %v717, %v751
  %v768 = vld [vmem:[%s7] sm:$0xf]
  %v769 = vld [vmem:[%s7 + $0x4] sm:$0xf]
  %v770 = vld [vmem:[%s7 + $0x8] sm:$0xf]
  %v771 = vld [vmem:[%s7 + $0xc] sm:$0xf]
  %v772 = vld [vmem:[%s7 + $0x10] sm:$0xf]
  %v773 = vpack.c.bf16 %v753, %v752
  %v774 = vpack.c.bf16 %v755, %v754
  %v775 = vpack.c.bf16 %v757, %v756
  %v776 = vpack.c.bf16 %v759, %v758
  %v777 = vpack.c.bf16 %v761, %v760
  %v778 = vpack.c.bf16 %v763, %v762
  %v779 = vpack.c.bf16 %v765, %v764
  %v780 = vpack.c.bf16 %v767, %v766
  %v781 = vld [vmem:[%s8] sm:$0xff]
  %v782 = vld [vmem:[%s8 + $0x8] sm:$0xff]
  %v783 = vld [vmem:[%s8 + $0x10] sm:$0xff]
  %v784 = vld [vmem:[%s8 + $0x18] sm:$0xff]
  %v785 = vld [vmem:[%s8 + $0x20] sm:$0xff]
  %787 = vset.pattern.permute.xlu0 0
  %788 = vperm.xlu0 %787, %v781
  %v789 = vpop.permute.xlu0 %788
  %792 = vset.pattern.permute.xlu0 0
  %793 = vperm.xlu0 %792, %v782
  %v794 = vpop.permute.xlu0 %793
  %797 = vset.pattern.permute.xlu0 0
  %798 = vperm.xlu0 %797, %v783
  %v799 = vpop.permute.xlu0 %798
  %802 = vset.pattern.permute.xlu0 0
  %803 = vperm.xlu0 %802, %v784
  %v804 = vpop.permute.xlu0 %803
  %807 = vset.pattern.permute.xlu0 0
  %808 = vperm.xlu0 %807, %v785
  %v809 = vpop.permute.xlu0 %808
  %v816 = vunpack.c.l.b16 %v768
  %v817 = vunpack.c.l.b16 %v769
  %v818 = vunpack.c.l.b16 %v770
  %v819 = vunpack.c.l.b16 %v771
  %v820 = vunpack.c.l.b16 %v772
  %v821 = vpack.c.b16 %v817, %v816
  %v822 = vpack.c.b16 %v819, %v818
  %v823 = vpack.c.b16 %v820, %v820
  %827 = vmatprep.subr.bf16.mxu0 0
  %828 = vmatpush1.bf16.msra.mxu0 %v773
  %829 = vmatprep.subr.bf16.mxu0 0
  %830 = vmatpush1.bf16.msra.mxu0 %v774
  %831 = vmatprep.subr.bf16.mxu0 0
  %832 = vmatpush1.bf16.msra.mxu0 %v775
  %833 = vmatprep.subr.bf16.mxu0 0
  %834 = vmatpush1.bf16.msra.mxu0 %v776
  %835 = vmatprep.subr.bf16.mxu0 0
  %836 = vmatpush1.bf16.msra.mxu0 %v777
  %837 = vmatprep.subr.bf16.mxu0 0
  %838 = vmatpush1.bf16.msra.mxu0 %v778
  %839 = vmatprep.subr.bf16.mxu0 0
  %840 = vmatpush1.bf16.msra.mxu0 %v779
  %841 = vmatprep.subr.bf16.mxu0 0
  %842 = vmatpush1.bf16.msra.mxu0 %v780
  %843 = vmatprep.subr.bf16.mxu0 0
  %844 = vmatpush1.bf16.msra.mxu0 0
  %845 = vmatprep.subr.bf16.mxu0 0
  %846 = vmatpush1.bf16.msra.mxu0 0
  %847 = vmatprep.subr.bf16.mxu0 0
  %848 = vmatpush1.bf16.msra.mxu0 0
  %849 = vmatprep.subr.bf16.mxu0 0
  %850 = vmatpush1.bf16.msra.mxu0 0
  %851 = vmatprep.subr.bf16.mxu0 0
  %852 = vmatpush1.bf16.msra.mxu0 0
  %853 = vmatprep.subr.bf16.mxu0 0
  %854 = vmatpush1.bf16.msra.mxu0 0
  %855 = vmatprep.subr.bf16.mxu0 0
  %856 = vmatpush1.bf16.msra.mxu0 0
  %857 = vmatprep.subr.bf16.mxu0 0
  %858 = vmatpush1.bf16.msra.mxu0 0
  %859 = vmatprep.mubr.bf16.mxu0 0
  %860 = vmatmul.mubr.bf16.gmra.mrb[0].mxu0 %v821
  %v861 = vpop.f32.mrb[0].mxu0
  %v862 = vadd.f32 %v789, %v861
  %v863 = vpop.f32.mrb[0].mxu0
  %v864 = vpop.f32.mrb[0].mxu0
  %v865 = vadd.f32 %v794, %v864
  %v866 = vpop.f32.mrb[0].mxu0
  %867 = vmatprep.mubr.bf16.mxu0 0
  %868 = vmatmul.mubr.bf16.gmra.mrb[0].mxu0 %v822
  %v869 = vpop.f32.mrb[0].mxu0
  %v870 = vadd.f32 %v799, %v869
  %v871 = vpop.f32.mrb[0].mxu0
  %v872 = vpop.f32.mrb[0].mxu0
  %v873 = vadd.f32 %v804, %v872
  %v874 = vpop.f32.mrb[0].mxu0
  %875 = vmatprep.mubr.bf16.mxu0 0
  %876 = vmatmul.mubr.bf16.gmra.mrb[0].mxu0 %v823
  %v877 = vpop.f32.mrb[0].mxu0
  %v878 = vadd.f32 %v809, %v877
  %v879 = vpop.f32.mrb[0].mxu0
  %v880 = vpop.f32.mrb[0].mxu0
  %v881 = vpop.f32.mrb[0].mxu0
  %882 = vdwg.mxu0
  %vm883 = vcmp.gt.f32.partialorder %v862, 0.0
  %vm884 = vcmp.gt.f32.partialorder %v865, 0.0
  %vm885 = vcmp.gt.f32.partialorder %v870, 0.0
  %vm886 = vcmp.gt.f32.partialorder %v873, 0.0
  %vm887 = vcmp.gt.f32.partialorder %v878, 0.0
  %v888 = vmul.f32 %v862, 0.01
  %v889 = vmul.f32 %v865, 0.01
  %v890 = vmul.f32 %v870, 0.01
  %v891 = vmul.f32 %v873, 0.01
  %v892 = vmul.f32 %v878, 0.01
  %v893 = vsel %vm883, %v862, %v888
  %v894 = vsel %vm884, %v865, %v889
  %v895 = vsel %vm885, %v870, %v890
  %v896 = vsel %vm886, %v873, %v891
  %v897 = vsel %vm887, %v878, %v892
  %v898 = vld [vmem:[%s9] sm:$0x3]
  %v899 = vpack.c.bf16 %v895, %v894
  %v900 = vpack.c.bf16 %v897, %v896
  %v901 = vld [vmem:[%s10] sm:$0xf]
  %903 = vset.pattern.permute.xlu0 0
  %904 = vperm.xlu0 %903, %v901
  %v905 = vpop.permute.xlu0 %904
  %v908 = vsel %vm152, %v898, 0
  %910 = vmatprep.subr.bf16.mxu0 0
  %911 = vmatpush1.bf16.msra.mxu0 %v899
  %912 = vmatprep.subr.bf16.mxu0 0
  %913 = vmatpush1.bf16.msra.mxu0 %v900
  %914 = vmatprep.subr.bf16.mxu0 0
  %915 = vmatpush1.bf16.msra.mxu0 0
  %916 = vmatprep.subr.bf16.mxu0 0
  %917 = vmatpush1.bf16.msra.mxu0 0
  %918 = vmatprep.subr.bf16.mxu0 0
  %919 = vmatpush1.bf16.msra.mxu0 0
  %920 = vmatprep.subr.bf16.mxu0 0
  %921 = vmatpush1.bf16.msra.mxu0 0
  %922 = vmatprep.subr.bf16.mxu0 0
  %923 = vmatpush1.bf16.msra.mxu0 0
  %924 = vmatprep.subr.bf16.mxu0 0
  %925 = vmatpush1.bf16.msra.mxu0 0
  %926 = vmatprep.subr.bf16.mxu0 0
  %927 = vmatpush1.bf16.msra.mxu0 0
  %928 = vmatprep.subr.bf16.mxu0 0
  %929 = vmatpush1.bf16.msra.mxu0 0
  %930 = vmatprep.subr.bf16.mxu0 0
  %931 = vmatpush1.bf16.msra.mxu0 0
  %932 = vmatprep.subr.bf16.mxu0 0
  %933 = vmatpush1.bf16.msra.mxu0 0
  %934 = vmatprep.subr.bf16.mxu0 0
  %935 = vmatpush1.bf16.msra.mxu0 0
  %936 = vmatprep.subr.bf16.mxu0 0
  %937 = vmatpush1.bf16.msra.mxu0 0
  %938 = vmatprep.subr.bf16.mxu0 0
  %939 = vmatpush1.bf16.msra.mxu0 0
  %940 = vmatprep.subr.bf16.mxu0 0
  %941 = vmatpush1.bf16.msra.mxu0 0
  %942 = vmatprep.mubr.bf16.mxu0 0
  %943 = vmatmul.mubr.bf16.gmra.mrb[0].mxu0 %v908
  %v944 = vpop.f32.mrb[0].mxu0
  %v945 = vadd.f32 %v905, %v944
  %v946 = vpop.f32.mrb[0].mxu0
  %v947 = vpop.f32.mrb[0].mxu0
  %v948 = vpop.f32.mrb[0].mxu0
  %949 = vdwg.mxu0
  %vm950 = vcmask 1043456
  %v951 = vsel %vm950, %v945, -inf
  %v952 = vrot.slane %v951, 4
  %v953 = vmax.f32 %v951, %v952
  %v954 = vrot.slane %v953, 2
  %v955 = vmax.f32 %v953, %v954
  %v956 = vrot.slane %v955, 1
  %v957 = vmax.f32 %v955, %v956
  %v958 = vsub.f32 %v945, %v957
  %v959 = vmul.f32 %v958, 1.442695
  %v960 = vpow.pop %v959
  %v961 = vsel %vm950, %v960, 0.0
  %v962 = vrot.slane %v961, 4
  %v963 = vadd.f32 %v961, %v962
  %v964 = vrot.slane %v963, 2
  %v965 = vadd.f32 %v963, %v964
  %v966 = vrot.slane %v965, 1
  %v967 = vadd.f32 %v965, %v966
  %v968 = vlog2.pop %v967
  %v969 = vmul.f32 %v968, 0.6931472
  %v970 = vsub.f32 %v958, %v969
  %v972 = vrot.slane %v970, 7
  %vm974 = vcmask 1040384
  %v975 = vsel %vm974, %v893, %v972
  %vm976 = vcmask 1044480
  %v977 = vsel %vm976, %v975, 0.0
  %978 = vst [vmem:[%s11] sm:$0xff] %v977
  // Predicated region
  $region46: #{net2048_forward.1} parent=0 // pred_check
    _
  $region47: #{net2048_forward.1} parent=0 // pred_check_branch
    %980 = sbr.rel (0) target = $region49
  $region48: #{net2048_forward.1} parent=0 // pred_region
    _
  $region49: #{net2048_forward.1} parent=0 // pred_fallthru
    _
  // Predicated region
  $region50: #{net2048_forward.1} parent=0 // pred_check
    _
  $region51: #{net2048_forward.1} parent=0 // pred_check_branch
    %982 = sbr.rel (0) target = $region53
  $region52: #{net2048_forward.1} parent=0 // pred_region
    _
  $region53: #{net2048_forward.1} parent=0 // pred_fallthru
    _

</llo_original>
